<compile_context>
chip_gen: v7x
topology: tpu7x:2x2x1
jax: 0.10.0
libtpu: 0.0.40
codegen_flags: <defaults>
</compile_context>

<pallas_src>
import functools

import jax
import jax.numpy as jnp
from jax.experimental import pallas as pl
from jax.experimental.pallas import tpu as pltpu


# --------------------------------------------------------------------------- conv tile
def _conv2x2_tile(xm, xh, w_mat, *, W, use_halo, zero_halo):
    """2x2 'same' conv on one flattened row-tile.

    xm    : (Cin, L) f32, TH image rows flattened row-major (L = TH*W), lane-dense.
    xh    : (Cin, HB) f32, flat block starting at the next image row (first W lanes used).
    w_mat : (Cout, 4*Cin) f32, taps folded into K; column (dh*2+dw)*Cin + ci.
    Returns (Cout, L) f32.
    """
    cin, L = xm.shape
    lane = jax.lax.broadcasted_iota(jnp.int32, (1, L), 1)
    last_col = (lane % W) == (W - 1)            # right 'same'-pad column
    last_row = lane >= (L - W)                  # bottom row of this tile

    x00 = xm
    # tap (0,1): left-rotate by one lane, zero the padded right column.
    x01 = jnp.where(last_col, 0.0, pltpu.roll(xm, shift=L - 1, axis=1))

    # tap (1,0): left-rotate by one image row; bottom row comes from the halo / zero pad.
    r10 = pltpu.roll(xm, shift=L - W, axis=1)
    if use_halo:
        hb = xh.shape[1]
        # Put the halo row (lanes [0, W) of xh) at intra-group lanes [hb-W, hb); it is
        # zeroed on the image's last row-tile (bottom 'same' padding).
        halo = jnp.where(zero_halo, 0.0, pltpu.roll(xh, shift=hb - W, axis=1))
        if L > hb:
            halo = jnp.concatenate([jnp.zeros((cin, L - hb), xm.dtype), halo], axis=1)
        x10 = jnp.where(last_row, halo, r10)
    else:
        # Single row-tile per image: the bottom row is always the zero pad.
        x10 = jnp.where(last_row, 0.0, r10)

    # tap (1,1): tap (1,0) left-rotated by one lane, padded right column zeroed.
    x11 = jnp.where(last_col, 0.0, pltpu.roll(x10, shift=L - 1, axis=1))

    slab = jnp.concatenate([x00, x01, x10, x11], axis=0)            # (4*Cin, L)
    return jnp.dot(w_mat, slab, preferred_element_type=jnp.float32)  # (Cout, L)


# ----------------------------------------------------------------------------- kernels
def _stats_kernel(xm_ref, xh_ref, w_ref, sum_ref, sq_ref, *, W, use_halo):
    """Pass 1: per-(image, row-tile) channel sum / sum-of-squares of the conv output."""
    i = pl.program_id(1)
    zero_halo = i == (pl.num_programs(1) - 1)
    conv = _conv2x2_tile(xm_ref[0], xh_ref[0], w_ref[...],
                         W=W, use_halo=use_halo, zero_halo=zero_halo)
    sum_ref[0, 0] = jnp.sum(conv, axis=1, keepdims=True)            # (Cout, 1)
    sq_ref[0, 0] = jnp.sum(conv * conv, axis=1, keepdims=True)      # (Cout, 1)


def _bn_lrelu_kernel(xm_ref, xh_ref, w_ref, scale_ref, shift_ref, o_ref, *, W, use_halo):
    """Pass 2: recompute the conv tile, apply folded BatchNorm affine + LeakyReLU(0.2)."""
    i = pl.program_id(1)
    zero_halo = i == (pl.num_programs(1) - 1)
    conv = _conv2x2_tile(xm_ref[0], xh_ref[0], w_ref[...],
                         W=W, use_halo=use_halo, zero_halo=zero_halo)
    z = conv * scale_ref[...] + shift_ref[...]                       # per-channel on sublanes
    o_ref[0] = jnp.where(z >= 0, z, 0.2 * z)


# ----------------------------------------------------------------------------- tiling
def _tile_vmem_bytes(th, w, cin, cout):
    l = th * w
    blocks = 2 * (cin * l + cin * 128 + cout * l + 2 * cout)   # double-buffered in/out blocks
    temps = 8 * cin * l + 3 * cout * l                         # shifted taps + slab + conv/act
    return 4 * (blocks + temps)


def _pick_tile_h(H, W, cin, cout, budget_bytes=12 * 1024 * 1024):
    """Largest row-tile whose working set fits a conservative VMEM budget (safe on v7x)."""
    if W > 128:
        # TODO(synk): halo fetch assumes W <= 128; very wide rows fall back to whole-image tiles.
        return H
    if _tile_vmem_bytes(H, W, cin, cout) <= budget_bytes:
        return H                                   # whole image per grid step, no halo needed
    for th in range(H - 1, 0, -1):
        if (H % th == 0 and (th * W) % 128 == 0
                and _tile_vmem_bytes(th, W, cin, cout) <= budget_bytes):
            return th
    return H                                       # pathological shapes: accept the big tile


# ----------------------------------------------------------------------------- wrapper
def conv_downsampling_block(x_nchw, weight, bias, gamma, beta, eps=1e-5):
    """x: (N, Cin, H, W); weight: (Cout, Cin, 2, 2); bias/gamma/beta: (Cout,)."""
    N, Cin, H, W = x_nchw.shape
    Cout = weight.shape[0]
    HW = H * W
    f32 = jnp.float32

    TH = _pick_tile_h(H, W, Cin, Cout)
    n_hblk = H // TH
    L = TH * W
    use_halo = n_hblk > 1

    # Channels on sublanes, flattened spatial on lanes.  Free reshape, no transpose, no pad.
    x_flat = x_nchw.reshape(N, Cin, HW).astype(f32)

    # Fold the 2x2 taps into the contraction dim: (Cout, Cin, 2, 2) -> (Cout, 4*Cin),
    # column order (dh*2+dw)*Cin + ci, matching the in-kernel slab row order.
    w_mat = jnp.transpose(weight, (0, 2, 3, 1)).reshape(Cout, 4 * Cin).astype(f32)
    # The conv bias cancels exactly under training-mode BatchNorm mean subtraction.
    del bias
    # TODO(synk): nn.BatchNorm2d running_mean/running_var buffer updates are not produced.

    # Halo: one small lane-aligned block of the flat image starting at the next row.
    halo_b = 128 if (HW % 128 == 0 and W <= 128) else HW
    halo_step = L // halo_b
    halo_last = HW // halo_b - 1

    grid = (N, n_hblk)
    main_spec = pl.BlockSpec((1, Cin, L), lambda n, i: (n, 0, i))
    halo_spec = pl.BlockSpec(
        (1, Cin, halo_b),
        lambda n, i: (n, 0, jnp.minimum((i + 1) * halo_step, halo_last)))
    w_spec = pl.BlockSpec((Cout, 4 * Cin), lambda n, i: (0, 0))
    cparams = pltpu.CompilerParams(
        dimension_semantics=("parallel", "parallel"),
        vmem_limit_bytes=32 * 1024 * 1024)

    # ---- pass 1: partial BatchNorm statistics (no conv intermediate written to HBM) ----
    psum, psq = pl.pallas_call(
        functools.partial(_stats_kernel, W=W, use_halo=use_halo),
        grid=grid,
        in_specs=[main_spec, halo_spec, w_spec],
        out_specs=[
            pl.BlockSpec((1, 1, Cout, 1), lambda n, i: (n, i, 0, 0)),
            pl.BlockSpec((1, 1, Cout, 1), lambda n, i: (n, i, 0, 0)),
        ],
        out_shape=(
            jax.ShapeDtypeStruct((N, n_hblk, Cout, 1), f32),
            jax.ShapeDtypeStruct((N, n_hblk, Cout, 1), f32),
        ),
        compiler_params=cparams,
    )(x_flat, x_flat, w_mat)

    # Global training-mode BN statistics -> folded per-channel scale/shift (tiny XLA math).
    m = float(N * HW)
    mean = jnp.sum(psum, axis=(0, 1)) / m                         # (Cout, 1)
    ex2 = jnp.sum(psq, axis=(0, 1)) / m                           # (Cout, 1)
    # Note: E[x^2]-E[x]^2 in f32 (clamped); adequate for post-conv activation scales.
    var = jnp.maximum(ex2 - mean * mean, 0.0)
    scale = gamma.astype(f32).reshape(Cout, 1) * jax.lax.rsqrt(var + eps)
    shift = beta.astype(f32).reshape(Cout, 1) - mean * scale

    # ---- pass 2: recompute conv (cheap, K=4*Cin) fused with BN affine + LeakyReLU(0.2) ----
    y = pl.pallas_call(
        functools.partial(_bn_lrelu_kernel, W=W, use_halo=use_halo),
        grid=grid,
        in_specs=[main_spec, halo_spec, w_spec,
                  pl.BlockSpec((Cout, 1), lambda n, i: (0, 0)),
                  pl.BlockSpec((Cout, 1), lambda n, i: (0, 0))],
        out_specs=pl.BlockSpec((1, Cout, L), lambda n, i: (n, 0, i)),
        out_shape=jax.ShapeDtypeStruct((N, Cout, HW), f32),
        compiler_params=cparams,
    )(x_flat, x_flat, w_mat, scale, shift)

    return y.reshape(N, Cout, H, W)                # free reshape -> NCHW, no transpose


# ----------------------------------------------------------------------------- reference
def _reference(x, weight, bias, gamma, beta, eps=1e-5):
    xp = jnp.pad(x, ((0, 0), (0, 0), (0, 1), (0, 1)))
    conv = jax.lax.conv_general_dilated(
        xp, weight, window_strides=(1, 1), padding="VALID",
        dimension_numbers=("NCHW", "OIHW", "NCHW"),
        precision=jax.lax.Precision.HIGHEST)
    conv = conv + bias.reshape(1, -1, 1, 1)
    mean = jnp.mean(conv, axis=(0, 2, 3), keepdims=True)
    var = jnp.mean((conv - mean) ** 2, axis=(0, 2, 3), keepdims=True)
    xhat = (conv - mean) * jax.lax.rsqrt(var + eps)
    yy = xhat * gamma.reshape(1, -1, 1, 1) + beta.reshape(1, -1, 1, 1)
    return jnp.where(yy >= 0, yy, 0.2 * yy)


if __name__ == "__main__":
    key = jax.random.PRNGKey(0)
    N, Cin, Cout, H, W = 2, 4, 8, 16, 16
    k_x, k_w, k_b = jax.random.split(key, 3)

    x = jax.random.normal(k_x, (N, Cin, H, W), jnp.float32)
    weight = 0.1 * jax.random.normal(k_w, (Cout, Cin, 2, 2), jnp.float32)
    bias = 0.1 * jax.random.normal(k_b, (Cout,), jnp.float32)
    gamma = 1.0 + 0.1 * jnp.arange(Cout, dtype=jnp.float32)
    beta = 0.05 * jnp.arange(Cout, dtype=jnp.float32)

    y = jax.jit(conv_downsampling_block)(x, weight, bias, gamma, beta)
    y = jax.block_until_ready(y)
    assert y.shape == (N, Cout, H, W) and y.dtype == jnp.float32

    y_ref = _reference(x, weight, bias, gamma, beta)
    max_err = float(jnp.max(jnp.abs(y - y_ref)))
    assert jnp.allclose(y, y_ref, atol=2e-3, rtol=2e-3), f"max_err={max_err}"

    print("KERNEL_OK")
</pallas_src>

<mosaic_0001>
module attributes {stable_mosaic.version = 11 : i64} {
  func.func @_stats_kernel(%arg0: i32, %arg1: i32, %arg2: memref<1x4x256xf32, #tpu.memory_space<vmem>>, %arg3: memref<1x4x128xf32, #tpu.memory_space<vmem>>, %arg4: memref<8x16xf32, #tpu.memory_space<vmem>>, %arg5: memref<1x1x8x1xf32, #tpu.memory_space<vmem>>, %arg6: memref<1x1x8x1xf32, #tpu.memory_space<vmem>>) attributes {dimension_semantics = [#tpu.dimension_semantics<parallel>, #tpu.dimension_semantics<parallel>], iteration_bounds = array<i64: 2, 1>, scalar_prefetch = 0 : i64, scratch_operands = 0 : i64, tpu.core_type = #tpu.core_type<tc>, window_params = [{transform_indices = @transform_0, window_bounds = array<i64: 1, 4, 256>}, {transform_indices = @transform_1, window_bounds = array<i64: 1, 4, 128>}, {pipeline_mode = #tpu.pipeline_mode<synchronous>, transform_indices = @transform_2, window_bounds = array<i64: 8, 16>}, {transform_indices = @transform_3, window_bounds = array<i64: 1, 1, 8, 1>}, {transform_indices = @transform_4, window_bounds = array<i64: 1, 1, 8, 1>}]} {
    %c0 = arith.constant 0 : index
    %c0_0 = arith.constant 0 : index
    %c0_1 = arith.constant 0 : index
    %0 = vector.load %arg2[%c0, %c0_0, %c0_1] : memref<1x4x256xf32, #tpu.memory_space<vmem>>, vector<1x4x256xf32>
    %1 = vector.shape_cast %0 : vector<1x4x256xf32> to vector<4x256xf32>
    %c0_2 = arith.constant 0 : index
    %c0_3 = arith.constant 0 : index
    %2 = vector.load %arg4[%c0_2, %c0_3] : memref<8x16xf32, #tpu.memory_space<vmem>>, vector<8x16xf32>
    %3 = tpu.iota {dimensions = array<i32: 1>} : vector<1x256xi32>
    %c16_i32 = arith.constant 16 : i32
    %c0_i32 = arith.constant 0 : i32
    %4 = arith.cmpi eq, %c16_i32, %c0_i32 : i32
    %c1_i32 = arith.constant 1 : i32
    %5 = arith.select %4, %c1_i32, %c16_i32 : i32
    %6 = vector.broadcast %5 : i32 to vector<1x256xi32>
    %7 = arith.remsi %3, %6 : vector<1x256xi32>
    %c0_i32_4 = arith.constant 0 : i32
    %8 = vector.broadcast %c0_i32_4 : i32 to vector<1x256xi32>
    %9 = arith.cmpi ne, %7, %8 : vector<1x256xi32>
    %c0_i32_5 = arith.constant 0 : i32
    %10 = vector.broadcast %c0_i32_5 : i32 to vector<1x256xi32>
    %11 = arith.cmpi slt, %7, %10 : vector<1x256xi32>
    %c0_i32_6 = arith.constant 0 : i32
    %12 = arith.cmpi slt, %5, %c0_i32_6 : i32
    %13 = vector.broadcast %12 : i1 to vector<1x256xi1>
    %14 = vector.broadcast %13 : vector<1x256xi1> to vector<1x256xi1>
    %15 = arith.xori %11, %14 : vector<1x256xi1>
    %16 = arith.andi %15, %9 : vector<1x256xi1>
    %17 = vector.broadcast %5 : i32 to vector<1x256xi32>
    %18 = arith.addi %7, %17 : vector<1x256xi32>
    %19 = arith.select %16, %18, %7 : vector<1x256xi1>, vector<1x256xi32>
    %c15_i32 = arith.constant 15 : i32
    %20 = vector.broadcast %c15_i32 : i32 to vector<1x256xi32>
    %21 = arith.cmpi eq, %19, %20 : vector<1x256xi32>
    %c240_i32 = arith.constant 240 : i32
    %22 = vector.broadcast %c240_i32 : i32 to vector<1x256xi32>
    %23 = arith.cmpi sge, %3, %22 : vector<1x256xi32>
    %c255_i32 = arith.constant 255 : i32
    %24 = tpu.dynamic_rotate %1 by %c255_i32 dim 1 : vector<4x256xf32>, i32 -> vector<4x256xf32>
    %cst = arith.constant 0.000000e+00 : f32
    %25 = vector.shape_cast %21 : vector<1x256xi1> to vector<1x256xi1>
    %26 = vector.broadcast %25 : vector<1x256xi1> to vector<4x256xi1>
    %27 = vector.broadcast %cst : f32 to vector<4x256xf32>
    %28 = arith.select %26, %27, %24 : vector<4x256xi1>, vector<4x256xf32>
    %c240_i32_7 = arith.constant 240 : i32
    %29 = tpu.dynamic_rotate %1 by %c240_i32_7 dim 1 : vector<4x256xf32>, i32 -> vector<4x256xf32>
    %cst_8 = arith.constant 0.000000e+00 : f32
    %30 = vector.shape_cast %23 : vector<1x256xi1> to vector<1x256xi1>
    %31 = vector.broadcast %30 : vector<1x256xi1> to vector<4x256xi1>
    %32 = vector.broadcast %cst_8 : f32 to vector<4x256xf32>
    %33 = arith.select %31, %32, %29 : vector<4x256xi1>, vector<4x256xf32>
    %c255_i32_9 = arith.constant 255 : i32
    %34 = tpu.dynamic_rotate %33 by %c255_i32_9 dim 1 : vector<4x256xf32>, i32 -> vector<4x256xf32>
    %cst_10 = arith.constant 0.000000e+00 : f32
    %35 = vector.shape_cast %21 : vector<1x256xi1> to vector<1x256xi1>
    %36 = vector.broadcast %35 : vector<1x256xi1> to vector<4x256xi1>
    %37 = vector.broadcast %cst_10 : f32 to vector<4x256xf32>
    %38 = arith.select %36, %37, %34 : vector<4x256xi1>, vector<4x256xf32>
    %39 = tpu.concatenate %1, %28, %33, %38 in 0 : vector<4x256xf32>, vector<4x256xf32>, vector<4x256xf32>, vector<4x256xf32> -> vector<16x256xf32>
    %cst_11 = arith.constant dense<0.000000e+00> : vector<8x256xf32>
    %40 = tpu.matmul %2, %39, %cst_11 {dimension_numbers = #tpu.dot_dimension_numbers<[1], [0], [0], [1], [0, 0, 1, 1], [], []>} : vector<8x16xf32>, vector<16x256xf32>, vector<8x256xf32> -> vector<8x256xf32>
    %cst_12 = arith.constant dense<0.000000e+00> : vector<8xf32>
    %41 = vector.multi_reduction <add>, %40, %cst_12 [1] : vector<8x256xf32> to vector<8xf32>
    %42 = vector.shape_cast %41 : vector<8xf32> to vector<8x1xf32>
    %c0_13 = arith.constant 0 : index
    %c0_14 = arith.constant 0 : index
    %c0_15 = arith.constant 0 : index
    %c0_16 = arith.constant 0 : index
    %43 = vector.load %arg5[%c0_13, %c0_14, %c0_15, %c0_16] : memref<1x1x8x1xf32, #tpu.memory_space<vmem>>, vector<1x1x8x1xf32>
    %44 = vector.shape_cast %43 : vector<1x1x8x1xf32> to vector<8x1xf32>
    %45 = vector.shape_cast %42 : vector<8x1xf32> to vector<1x1x8x1xf32>
    tpu.vector_store %arg5[%c0_13, %c0_14, %c0_15, %c0_16], %45 {strides = array<i32>} : memref<1x1x8x1xf32, #tpu.memory_space<vmem>>, vector<1x1x8x1xf32>,
    %46 = arith.mulf %40, %40 : vector<8x256xf32>
    %cst_17 = arith.constant dense<0.000000e+00> : vector<8xf32>
    %47 = vector.multi_reduction <add>, %46, %cst_17 [1] : vector<8x256xf32> to vector<8xf32>
    %48 = vector.shape_cast %47 : vector<8xf32> to vector<8x1xf32>
    %c0_18 = arith.constant 0 : index
    %c0_19 = arith.constant 0 : index
    %c0_20 = arith.constant 0 : index
    %c0_21 = arith.constant 0 : index
    %49 = vector.load %arg6[%c0_18, %c0_19, %c0_20, %c0_21] : memref<1x1x8x1xf32, #tpu.memory_space<vmem>>, vector<1x1x8x1xf32>
    %50 = vector.shape_cast %49 : vector<1x1x8x1xf32> to vector<8x1xf32>
    %51 = vector.shape_cast %48 : vector<8x1xf32> to vector<1x1x8x1xf32>
    tpu.vector_store %arg6[%c0_18, %c0_19, %c0_20, %c0_21], %51 {strides = array<i32>} : memref<1x1x8x1xf32, #tpu.memory_space<vmem>>, vector<1x1x8x1xf32>,
    return
  }
  func.func @transform_0(%arg0: i32, %arg1: i32) -> (i32, i32, i32) {
    %c0_i32 = arith.constant 0 : i32
    %c0_i32_0 = arith.constant 0 : i32
    return %arg0, %c0_i32, %arg1 : i32, i32, i32
  }
  func.func @transform_1(%arg0: i32, %arg1: i32) -> (i32, i32, i32) {
    %c1_i32 = arith.constant 1 : i32
    %0 = arith.addi %arg1, %c1_i32 : i32
    %c2_i32 = arith.constant 2 : i32
    %1 = arith.muli %0, %c2_i32 : i32
    %c1_i32_0 = arith.constant 1 : i32
    %2 = arith.minsi %1, %c1_i32_0 : i32
    %c0_i32 = arith.constant 0 : i32
    %c0_i32_1 = arith.constant 0 : i32
    return %arg0, %c0_i32, %2 : i32, i32, i32
  }
  func.func @transform_2(%arg0: i32, %arg1: i32) -> (i32, i32) {
    %c0_i32 = arith.constant 0 : i32
    %c0_i32_0 = arith.constant 0 : i32
    %c0_i32_1 = arith.constant 0 : i32
    return %c0_i32, %c0_i32_0 : i32, i32
  }
  func.func @transform_3(%arg0: i32, %arg1: i32) -> (i32, i32, i32, i32) {
    %c0_i32 = arith.constant 0 : i32
    %c0_i32_0 = arith.constant 0 : i32
    %c0_i32_1 = arith.constant 0 : i32
    return %arg0, %arg1, %c0_i32, %c0_i32_0 : i32, i32, i32, i32
  }
  func.func @transform_4(%arg0: i32, %arg1: i32) -> (i32, i32, i32, i32) {
    %c0_i32 = arith.constant 0 : i32
    %c0_i32_0 = arith.constant 0 : i32
    %c0_i32_1 = arith.constant 0 : i32
    return %arg0, %arg1, %c0_i32, %c0_i32_0 : i32, i32, i32, i32
  }
}

module attributes {stable_mosaic.version = 11 : i64} {
  func.func @_bn_lrelu_kernel(%arg0: i32, %arg1: i32, %arg2: memref<1x4x256xf32, #tpu.memory_space<vmem>>, %arg3: memref<1x4x128xf32, #tpu.memory_space<vmem>>, %arg4: memref<8x16xf32, #tpu.memory_space<vmem>>, %arg5: memref<8x1xf32, #tpu.memory_space<vmem>>, %arg6: memref<8x1xf32, #tpu.memory_space<vmem>>, %arg7: memref<1x8x256xf32, #tpu.memory_space<vmem>>) attributes {dimension_semantics = [#tpu.dimension_semantics<parallel>, #tpu.dimension_semantics<parallel>], iteration_bounds = array<i64: 2, 1>, scalar_prefetch = 0 : i64, scratch_operands = 0 : i64, tpu.core_type = #tpu.core_type<tc>, window_params = [{transform_indices = @transform_0, window_bounds = array<i64: 1, 4, 256>}, {transform_indices = @transform_1, window_bounds = array<i64: 1, 4, 128>}, {pipeline_mode = #tpu.pipeline_mode<synchronous>, transform_indices = @transform_2, window_bounds = array<i64: 8, 16>}, {pipeline_mode = #tpu.pipeline_mode<synchronous>, transform_indices = @transform_3, window_bounds = array<i64: 8, 1>}, {pipeline_mode = #tpu.pipeline_mode<synchronous>, transform_indices = @transform_4, window_bounds = array<i64: 8, 1>}, {transform_indices = @transform_5, window_bounds = array<i64: 1, 8, 256>}]} {
    %c0 = arith.constant 0 : index
    %c0_0 = arith.constant 0 : index
    %c0_1 = arith.constant 0 : index
    %0 = vector.load %arg2[%c0, %c0_0, %c0_1] : memref<1x4x256xf32, #tpu.memory_space<vmem>>, vector<1x4x256xf32>
    %1 = vector.shape_cast %0 : vector<1x4x256xf32> to vector<4x256xf32>
    %c0_2 = arith.constant 0 : index
    %c0_3 = arith.constant 0 : index
    %2 = vector.load %arg4[%c0_2, %c0_3] : memref<8x16xf32, #tpu.memory_space<vmem>>, vector<8x16xf32>
    %3 = tpu.iota {dimensions = array<i32: 1>} : vector<1x256xi32>
    %c16_i32 = arith.constant 16 : i32
    %c0_i32 = arith.constant 0 : i32
    %4 = arith.cmpi eq, %c16_i32, %c0_i32 : i32
    %c1_i32 = arith.constant 1 : i32
    %5 = arith.select %4, %c1_i32, %c16_i32 : i32
    %6 = vector.broadcast %5 : i32 to vector<1x256xi32>
    %7 = arith.remsi %3, %6 : vector<1x256xi32>
    %c0_i32_4 = arith.constant 0 : i32
    %8 = vector.broadcast %c0_i32_4 : i32 to vector<1x256xi32>
    %9 = arith.cmpi ne, %7, %8 : vector<1x256xi32>
    %c0_i32_5 = arith.constant 0 : i32
    %10 = vector.broadcast %c0_i32_5 : i32 to vector<1x256xi32>
    %11 = arith.cmpi slt, %7, %10 : vector<1x256xi32>
    %c0_i32_6 = arith.constant 0 : i32
    %12 = arith.cmpi slt, %5, %c0_i32_6 : i32
    %13 = vector.broadcast %12 : i1 to vector<1x256xi1>
    %14 = vector.broadcast %13 : vector<1x256xi1> to vector<1x256xi1>
    %15 = arith.xori %11, %14 : vector<1x256xi1>
    %16 = arith.andi %15, %9 : vector<1x256xi1>
    %17 = vector.broadcast %5 : i32 to vector<1x256xi32>
    %18 = arith.addi %7, %17 : vector<1x256xi32>
    %19 = arith.select %16, %18, %7 : vector<1x256xi1>, vector<1x256xi32>
    %c15_i32 = arith.constant 15 : i32
    %20 = vector.broadcast %c15_i32 : i32 to vector<1x256xi32>
    %21 = arith.cmpi eq, %19, %20 : vector<1x256xi32>
    %c240_i32 = arith.constant 240 : i32
    %22 = vector.broadcast %c240_i32 : i32 to vector<1x256xi32>
    %23 = arith.cmpi sge, %3, %22 : vector<1x256xi32>
    %c255_i32 = arith.constant 255 : i32
    %24 = tpu.dynamic_rotate %1 by %c255_i32 dim 1 : vector<4x256xf32>, i32 -> vector<4x256xf32>
    %cst = arith.constant 0.000000e+00 : f32
    %25 = vector.shape_cast %21 : vector<1x256xi1> to vector<1x256xi1>
    %26 = vector.broadcast %25 : vector<1x256xi1> to vector<4x256xi1>
    %27 = vector.broadcast %cst : f32 to vector<4x256xf32>
    %28 = arith.select %26, %27, %24 : vector<4x256xi1>, vector<4x256xf32>
    %c240_i32_7 = arith.constant 240 : i32
    %29 = tpu.dynamic_rotate %1 by %c240_i32_7 dim 1 : vector<4x256xf32>, i32 -> vector<4x256xf32>
    %cst_8 = arith.constant 0.000000e+00 : f32
    %30 = vector.shape_cast %23 : vector<1x256xi1> to vector<1x256xi1>
    %31 = vector.broadcast %30 : vector<1x256xi1> to vector<4x256xi1>
    %32 = vector.broadcast %cst_8 : f32 to vector<4x256xf32>
    %33 = arith.select %31, %32, %29 : vector<4x256xi1>, vector<4x256xf32>
    %c255_i32_9 = arith.constant 255 : i32
    %34 = tpu.dynamic_rotate %33 by %c255_i32_9 dim 1 : vector<4x256xf32>, i32 -> vector<4x256xf32>
    %cst_10 = arith.constant 0.000000e+00 : f32
    %35 = vector.shape_cast %21 : vector<1x256xi1> to vector<1x256xi1>
    %36 = vector.broadcast %35 : vector<1x256xi1> to vector<4x256xi1>
    %37 = vector.broadcast %cst_10 : f32 to vector<4x256xf32>
    %38 = arith.select %36, %37, %34 : vector<4x256xi1>, vector<4x256xf32>
    %39 = tpu.concatenate %1, %28, %33, %38 in 0 : vector<4x256xf32>, vector<4x256xf32>, vector<4x256xf32>, vector<4x256xf32> -> vector<16x256xf32>
    %cst_11 = arith.constant dense<0.000000e+00> : vector<8x256xf32>
    %40 = tpu.matmul %2, %39, %cst_11 {dimension_numbers = #tpu.dot_dimension_numbers<[1], [0], [0], [1], [0, 0, 1, 1], [], []>} : vector<8x16xf32>, vector<16x256xf32>, vector<8x256xf32> -> vector<8x256xf32>
    %c0_12 = arith.constant 0 : index
    %c0_13 = arith.constant 0 : index
    %41 = vector.load %arg5[%c0_12, %c0_13] : memref<8x1xf32, #tpu.memory_space<vmem>>, vector<8x1xf32>
    %42 = vector.broadcast %41 : vector<8x1xf32> to vector<8x256xf32>
    %43 = arith.mulf %40, %42 : vector<8x256xf32>
    %c0_14 = arith.constant 0 : index
    %c0_15 = arith.constant 0 : index
    %44 = vector.load %arg6[%c0_14, %c0_15] : memref<8x1xf32, #tpu.memory_space<vmem>>, vector<8x1xf32>
    %45 = vector.broadcast %44 : vector<8x1xf32> to vector<8x256xf32>
    %46 = arith.addf %43, %45 : vector<8x256xf32>
    %cst_16 = arith.constant 0.000000e+00 : f32
    %47 = vector.broadcast %cst_16 : f32 to vector<8x256xf32>
    %48 = arith.cmpf oge, %46, %47 : vector<8x256xf32>
    %cst_17 = arith.constant 2.000000e-01 : f32
    %49 = vector.broadcast %cst_17 : f32 to vector<8x256xf32>
    %50 = arith.mulf %49, %46 : vector<8x256xf32>
    %51 = arith.select %48, %46, %50 : vector<8x256xi1>, vector<8x256xf32>
    %c0_18 = arith.constant 0 : index
    %c0_19 = arith.constant 0 : index
    %c0_20 = arith.constant 0 : index
    %52 = vector.load %arg7[%c0_18, %c0_19, %c0_20] : memref<1x8x256xf32, #tpu.memory_space<vmem>>, vector<1x8x256xf32>
    %53 = vector.shape_cast %52 : vector<1x8x256xf32> to vector<8x256xf32>
    %54 = vector.shape_cast %51 : vector<8x256xf32> to vector<1x8x256xf32>
    tpu.vector_store %arg7[%c0_18, %c0_19, %c0_20], %54 {strides = array<i32>} : memref<1x8x256xf32, #tpu.memory_space<vmem>>, vector<1x8x256xf32>,
    return
  }
  func.func @transform_0(%arg0: i32, %arg1: i32) -> (i32, i32, i32) {
    %c0_i32 = arith.constant 0 : i32
    %c0_i32_0 = arith.constant 0 : i32
    return %arg0, %c0_i32, %arg1 : i32, i32, i32
  }
  func.func @transform_1(%arg0: i32, %arg1: i32) -> (i32, i32, i32) {
    %c1_i32 = arith.constant 1 : i32
    %0 = arith.addi %arg1, %c1_i32 : i32
    %c2_i32 = arith.constant 2 : i32
    %1 = arith.muli %0, %c2_i32 : i32
    %c1_i32_0 = arith.constant 1 : i32
    %2 = arith.minsi %1, %c1_i32_0 : i32
    %c0_i32 = arith.constant 0 : i32
    %c0_i32_1 = arith.constant 0 : i32
    return %arg0, %c0_i32, %2 : i32, i32, i32
  }
  func.func @transform_2(%arg0: i32, %arg1: i32) -> (i32, i32) {
    %c0_i32 = arith.constant 0 : i32
    %c0_i32_0 = arith.constant 0 : i32
    %c0_i32_1 = arith.constant 0 : i32
    return %c0_i32, %c0_i32_0 : i32, i32
  }
  func.func @transform_3(%arg0: i32, %arg1: i32) -> (i32, i32) {
    %c0_i32 = arith.constant 0 : i32
    %c0_i32_0 = arith.constant 0 : i32
    %c0_i32_1 = arith.constant 0 : i32
    return %c0_i32, %c0_i32_0 : i32, i32
  }
  func.func @transform_4(%arg0: i32, %arg1: i32) -> (i32, i32) {
    %c0_i32 = arith.constant 0 : i32
    %c0_i32_0 = arith.constant 0 : i32
    %c0_i32_1 = arith.constant 0 : i32
    return %c0_i32, %c0_i32_0 : i32, i32
  }
  func.func @transform_5(%arg0: i32, %arg1: i32) -> (i32, i32, i32) {
    %c0_i32 = arith.constant 0 : i32
    %c0_i32_0 = arith.constant 0 : i32
    return %arg0, %c0_i32, %arg1 : i32, i32, i32
  }
}

</mosaic_0001>

<llo_original>
// kernel: conv_downsampling_block.3
$region0: #{conv_downsampling_block.3}
  #allocation0 [shape = 'u32[]', space=smem, size = 0x4, offset = 0x4, fixed_abs, tag = 'smem constant byte address 0x4 - core index']
  #allocation1 [shape = 'u32[144,128]{1,0:T(1,128)}', space=vmem, size = 0x12000, scoped, tag = 'internal scratch']
  %s0 = inlined_call_operand.vmem [shape: f32[2,4,256], index: 0, kind: input, shape index: {}, may-alias: {0,1}]
  %s1 = inlined_call_operand.vmem [shape: f32[2,4,256], index: 1, kind: input, shape index: {}, may-alias: {0,1}]
  %s2 = inlined_call_operand.vmem [shape: f32[8,16], index: 2, kind: input, shape index: {}]
  %s3 = inlined_call_operand.vmem [shape: f32[8,1], index: 3, kind: input, shape index: {}]
  %s4 = inlined_call_operand.vmem [shape: f32[8,1], index: 4, kind: input, shape index: {}]
  %s5 = inlined_call_operand.vmem [shape: f32[2,8,256], index: 5, kind: output, shape index: {}]
  %s6 = sld [smem:[#allocation0]]
  $region53: #{conv_downsampling_block.3} parent=0
    _
  %s8 = ssub.s32 1, %s6
  %s9 = scalar_select 0, %s8, %s6
  loop: start=0, step=1, limit=4
  $region2: #{conv_downsampling_block.3} parent=0 // loop_pre_header
    _
  $region3: #{conv_downsampling_block.3} parent=0 // loop_header
    %s11 = sphi 0, %s15
    %p12 = scmp.ge.s32.totalorder %s11, 4
    %s18 = sphi 0, %s30
    %s19 = sphi 0, %s26
    %s20 = sphi 0, %s18
    %s21 = sphi 0, %s19
    %s22 = sphi 0, %s20
    %s23 = sphi 0, %s21
    %s35 = sphi 0, %s37
    %s38 = sphi 0, %s35
    %s39 = sphi 0, %s38
    %s55 = sphi 0, %s39
    %s71 = sphi 0, %s73
    %s74 = sphi 0, %s71
    %s75 = sphi 0, %s74
    %s91 = sphi 0, %s75
    %s95 = sphi 0, %s95
    %s97 = sphi 0, %s95
    %s98 = sphi 0, %s97
    %s112 = sphi 0, %s98
    %s116 = sphi 0, %s116
    %s118 = sphi 0, %s116
    %s119 = sphi 0, %s118
    %s133 = sphi 0, %s119
    %s137 = sphi 0, %s137
    %s139 = sphi 0, %s137
    %s140 = sphi 0, %s139
    %s154 = sphi 0, %s140
    %s162 = sphi 0, %s164
    %s165 = sphi 0, %s162
    %s166 = sphi 0, %s165
    %s182 = sphi 0, %s166
  $region4: #{conv_downsampling_block.3} parent=0 // loop_header_branch
    %14 = sbr.rel (%p12) target = $region8
  $region5: #{conv_downsampling_block.3} parent=0 // loop_body
    %s16 = ssub.s32 %s11, 1
    %s17 = ssub.s32 %s11, 2
    %s24 = sadd.s32 1, %s19
    %p25 = scmp.ge.s32.totalorder %s24, 1
    %s26 = scalar_select %p25, 0, %s24
    %s27 = sadd.s32 1, %s18
    %s28 = scalar_select %p25, %s27, %s18
    %p29 = scmp.ge.s32.totalorder %s28, 2
    %s30 = scalar_select %p29, 0, %s28
    %s31 = ssub.s32 %s18, %s30
    %s32 = ssub.s32 %s19, %s26
    %s33 = sor.u32 %s31, %s32
    %p34 = scmp.eq.s32.totalorder %s33, 0
    %s36 = sadd.s32 %s35, 1
    %s37 = scalar_select %p34, %s35, %s36
    %p40 = pneg %p34
    %p41 = scmp.eq.s32.totalorder %s11, 1
    %p42 = por %p40, %p41
    %p43 = scmp.ne.s32.totalorder %s35, %s38
    %p44 = scmp.eq.s32.totalorder %s11, 0
    %p45 = por %p43, %p44
    %p46 = scmp.ne.s32.totalorder %s35, %s38
    %p47 = scmp.eq.s32.totalorder %s16, 1
    %p48 = por %p46, %p47
    %p49 = scmp.ne.s32.totalorder %s38, %s39
    %p50 = scmp.eq.s32.totalorder %s16, 0
    %p51 = por %p49, %p50
    %p52 = scmp.ne.s32.totalorder %s38, %s39
    %p53 = scmp.eq.s32.totalorder %s17, 1
    %p54 = por %p52, %p53
    %p56 = scmp.ne.s32.totalorder %s39, %s55
    %p57 = scmp.eq.s32.totalorder %s17, 0
    %p58 = por %p56, %p57
    %s59 = sadd.s32 %s19, 1
    %s60 = smul.u32 %s59, 2
    %p61 = scmp.lt.s32.totalorder %s60, 1
    %s62 = scalar_select %p61, %s60, 1
    %s63 = sadd.s32 %s26, 1
    %s64 = smul.u32 %s63, 2
    %p65 = scmp.lt.s32.totalorder %s64, 1
    %s66 = scalar_select %p65, %s64, 1
    %s67 = ssub.s32 %s18, %s30
    %s68 = ssub.s32 %s62, %s66
    %s69 = sor.u32 %s67, %s68
    %p70 = scmp.eq.s32.totalorder %s69, 0
    %s72 = sadd.s32 %s71, 1
    %s73 = scalar_select %p70, %s71, %s72
    %p76 = pneg %p70
    %p77 = scmp.eq.s32.totalorder %s11, 1
    %p78 = por %p76, %p77
    %p79 = scmp.ne.s32.totalorder %s71, %s74
    %p80 = scmp.eq.s32.totalorder %s11, 0
    %p81 = por %p79, %p80
    %p82 = scmp.ne.s32.totalorder %s71, %s74
    %p83 = scmp.eq.s32.totalorder %s16, 1
    %p84 = por %p82, %p83
    %p85 = scmp.ne.s32.totalorder %s74, %s75
    %p86 = scmp.eq.s32.totalorder %s16, 0
    %p87 = por %p85, %p86
    %p88 = scmp.ne.s32.totalorder %s74, %s75
    %p89 = scmp.eq.s32.totalorder %s17, 1
    %p90 = por %p88, %p89
    %p92 = scmp.ne.s32.totalorder %s75, %s91
    %p93 = scmp.eq.s32.totalorder %s17, 0
    %p94 = por %p92, %p93
    %s96 = sadd.s32 %s95, 1
    %p99 = scmp.eq.s32.totalorder %s11, 1
    %p100 = scmp.ne.s32.totalorder %s95, %s97
    %p101 = scmp.eq.s32.totalorder %s11, 0
    %p102 = por %p100, %p101
    %p103 = scmp.ne.s32.totalorder %s95, %s97
    %p104 = scmp.eq.s32.totalorder %s16, 1
    %p105 = por %p103, %p104
    %p106 = scmp.ne.s32.totalorder %s97, %s98
    %p107 = scmp.eq.s32.totalorder %s16, 0
    %p108 = por %p106, %p107
    %p109 = scmp.ne.s32.totalorder %s97, %s98
    %p110 = scmp.eq.s32.totalorder %s17, 1
    %p111 = por %p109, %p110
    %p113 = scmp.ne.s32.totalorder %s98, %s112
    %p114 = scmp.eq.s32.totalorder %s17, 0
    %p115 = por %p113, %p114
    %s117 = sadd.s32 %s116, 1
    %p120 = scmp.eq.s32.totalorder %s11, 1
    %p121 = scmp.ne.s32.totalorder %s116, %s118
    %p122 = scmp.eq.s32.totalorder %s11, 0
    %p123 = por %p121, %p122
    %p124 = scmp.ne.s32.totalorder %s116, %s118
    %p125 = scmp.eq.s32.totalorder %s16, 1
    %p126 = por %p124, %p125
    %p127 = scmp.ne.s32.totalorder %s118, %s119
    %p128 = scmp.eq.s32.totalorder %s16, 0
    %p129 = por %p127, %p128
    %p130 = scmp.ne.s32.totalorder %s118, %s119
    %p131 = scmp.eq.s32.totalorder %s17, 1
    %p132 = por %p130, %p131
    %p134 = scmp.ne.s32.totalorder %s119, %s133
    %p135 = scmp.eq.s32.totalorder %s17, 0
    %p136 = por %p134, %p135
    %s138 = sadd.s32 %s137, 1
    %p141 = scmp.eq.s32.totalorder %s11, 1
    %p142 = scmp.ne.s32.totalorder %s137, %s139
    %p143 = scmp.eq.s32.totalorder %s11, 0
    %p144 = por %p142, %p143
    %p145 = scmp.ne.s32.totalorder %s137, %s139
    %p146 = scmp.eq.s32.totalorder %s16, 1
    %p147 = por %p145, %p146
    %p148 = scmp.ne.s32.totalorder %s139, %s140
    %p149 = scmp.eq.s32.totalorder %s16, 0
    %p150 = por %p148, %p149
    %p151 = scmp.ne.s32.totalorder %s139, %s140
    %p152 = scmp.eq.s32.totalorder %s17, 1
    %p153 = por %p151, %p152
    %p155 = scmp.ne.s32.totalorder %s140, %s154
    %p156 = scmp.eq.s32.totalorder %s17, 0
    %p157 = por %p155, %p156
    %s158 = ssub.s32 %s18, %s30
    %s159 = ssub.s32 %s19, %s26
    %s160 = sor.u32 %s158, %s159
    %p161 = scmp.eq.s32.totalorder %s160, 0
    %s163 = sadd.s32 %s162, 1
    %s164 = scalar_select %p161, %s162, %s163
    %p167 = pneg %p161
    %p168 = scmp.eq.s32.totalorder %s11, 1
    %p169 = por %p167, %p168
    %p170 = scmp.ne.s32.totalorder %s162, %s165
    %p171 = scmp.eq.s32.totalorder %s11, 0
    %p172 = por %p170, %p171
    %p173 = scmp.ne.s32.totalorder %s162, %s165
    %p174 = scmp.eq.s32.totalorder %s16, 1
    %p175 = por %p173, %p174
    %p176 = scmp.ne.s32.totalorder %s165, %s166
    %p177 = scmp.eq.s32.totalorder %s16, 0
    %p178 = por %p176, %p177
    %p179 = scmp.ne.s32.totalorder %s165, %s166
    %p180 = scmp.eq.s32.totalorder %s17, 1
    %p181 = por %p179, %p180
    %p183 = scmp.ne.s32.totalorder %s166, %s182
    %p184 = scmp.eq.s32.totalorder %s17, 0
    %p185 = por %p183, %p184
    %p186 = scmp.le.s32.totalorder 1, %s11
    %p187 = scmp.lt.s32.totalorder %s11, 3
    %p188 = pnand %p186, %p187
    %p189 = pneg %p188
    // Predicated region
    $region9: #{conv_downsampling_block.3} parent=5 // pred_check
      _
    $region10: #{conv_downsampling_block.3} parent=5 // pred_check_branch
      %191 = sbr.rel (%p188) target = $region12
    $region11: #{conv_downsampling_block.3} parent=5 // pred_region
      %s192 = ssub.s32 %s11, 1
      // Predicated region
      $region13: #{conv_downsampling_block.3} parent=11 // pred_check
        %p193 = pneg %p108
      $region14: #{conv_downsampling_block.3} parent=11 // pred_check_branch
        %195 = sbr.rel (%p193) target = $region16
      $region15: #{conv_downsampling_block.3} parent=11 // pred_region
        _
      $region16: #{conv_downsampling_block.3} parent=11 // pred_fallthru
        _
      // Predicated region
      $region17: #{conv_downsampling_block.3} parent=11 // pred_check
        %p196 = pneg %p129
      $region18: #{conv_downsampling_block.3} parent=11 // pred_check_branch
        %198 = sbr.rel (%p196) target = $region20
      $region19: #{conv_downsampling_block.3} parent=11 // pred_region
        _
      $region20: #{conv_downsampling_block.3} parent=11 // pred_fallthru
        _
      // Predicated region
      $region21: #{conv_downsampling_block.3} parent=11 // pred_check
        %p199 = pneg %p150
      $region22: #{conv_downsampling_block.3} parent=11 // pred_check_branch
        %201 = sbr.rel (%p199) target = $region24
      $region23: #{conv_downsampling_block.3} parent=11 // pred_region
        _
      $region24: #{conv_downsampling_block.3} parent=11 // pred_fallthru
        _
    $region12: #{conv_downsampling_block.3} parent=5 // pred_fallthru
      _
    %p202 = scmp.lt.s32.totalorder %s11, 2
    // Predicated region
    $region25: #{conv_downsampling_block.3} parent=5 // pred_check
      %p203 = pneg %p202
    $region26: #{conv_downsampling_block.3} parent=5 // pred_check_branch
      %205 = sbr.rel (%p203) target = $region28
    $region27: #{conv_downsampling_block.3} parent=5 // pred_region
      // Predicated region
      $region29: #{conv_downsampling_block.3} parent=27 // pred_check
        %p206 = pneg %p45
      $region30: #{conv_downsampling_block.3} parent=27 // pred_check_branch
        %208 = sbr.rel (%p206) target = $region32
      $region31: #{conv_downsampling_block.3} parent=27 // pred_region
        %s209 = smul.u32 2, %s19
        %p210 = scmp.lt.s32.totalorder %s18, 1
        %s211 = scalar_select %p210, %s18, 1
        %p212 = scmp.lt.s32.totalorder %s209, 1
        %s213 = scalar_select %p212, %s209, 1
        %s214 = smul.addr %s211, 2
        %s215 = sadd.s32 %s213, %s214
        %s216 = smul.addr %s215, 4
        %s217 = scalar_lea.vmem %s0, %s216
        %s218 = smul.u32 2, %s19
      $region32: #{conv_downsampling_block.3} parent=27 // pred_fallthru
        _
      // Predicated region
      $region33: #{conv_downsampling_block.3} parent=27 // pred_check
        %p219 = pneg %p81
      $region34: #{conv_downsampling_block.3} parent=27 // pred_check_branch
        %221 = sbr.rel (%p219) target = $region36
      $region35: #{conv_downsampling_block.3} parent=27 // pred_region
        %s222 = sadd.s32 %s19, 1
        %s223 = smul.u32 %s222, 2
        %p224 = scmp.lt.s32.totalorder %s223, 1
        %s225 = scalar_select %p224, %s223, 1
        %p226 = scmp.lt.s32.totalorder %s18, 1
        %s227 = scalar_select %p226, %s18, 1
        %p228 = scmp.lt.s32.totalorder %s225, 1
        %s229 = scalar_select %p228, %s225, 1
        %s230 = smul.addr %s227, 2
        %s231 = sadd.s32 %s229, %s230
        %s232 = smul.addr %s231, 4
        %s233 = scalar_lea.vmem %s1, %s232
        %s234 = sadd.s32 %s19, 1
        %s235 = smul.u32 %s234, 2
        %p236 = scmp.lt.s32.totalorder %s235, 1
        %s237 = scalar_select %p236, %s235, 1
      $region36: #{conv_downsampling_block.3} parent=27 // pred_fallthru
        _
    $region28: #{conv_downsampling_block.3} parent=5 // pred_fallthru
      _
    %p238 = scmp.le.s32.totalorder 1, %s11
    %p239 = scmp.lt.s32.totalorder %s11, 3
    %p240 = pnand %p238, %p239
    %p241 = pneg %p240
    // Predicated region
    $region37: #{conv_downsampling_block.3} parent=5 // pred_check
      _
    $region38: #{conv_downsampling_block.3} parent=5 // pred_check_branch
      %243 = sbr.rel (%p240) target = $region40
    $region39: #{conv_downsampling_block.3} parent=5 // pred_region
      %s244 = ssub.s32 %s11, 1
      %s245 = smul.u32 2, %s21
      %p246 = scmp.lt.s32.totalorder %s20, 1
      %s247 = scalar_select %p246, %s20, 1
      %p248 = scmp.lt.s32.totalorder %s245, 1
      %s249 = scalar_select %p248, %s245, 1
      %s250 = smul.addr %s247, 2
      %s251 = sadd.s32 %s249, %s250
      %s252 = smul.addr %s251, 4
      %s253 = scalar_lea.vmem %s0, %s252
      %p254 = pneg %p51
      %p255 = pneg %p48
      %s256 = sadd.s32 %s21, 1
      %s257 = smul.u32 %s256, 2
      %p258 = scmp.lt.s32.totalorder %s257, 1
      %s259 = scalar_select %p258, %s257, 1
      %p260 = scmp.lt.s32.totalorder %s20, 1
      %s261 = scalar_select %p260, %s20, 1
      %p262 = scmp.lt.s32.totalorder %s259, 1
      %s263 = scalar_select %p262, %s259, 1
      %s264 = smul.addr %s261, 2
      %s265 = sadd.s32 %s263, %s264
      %s266 = smul.addr %s265, 4
      %s267 = scalar_lea.vmem %s1, %s266
      %p268 = pneg %p87
      %p269 = pneg %p84
      %p270 = pneg %p108
      %p271 = pneg %p105
      %p272 = pneg %p129
      %p273 = pneg %p126
      %p274 = pneg %p150
      %p275 = pneg %p147
      %p276 = pneg %p178
      %p277 = pneg %p175
      %s278 = smul.u32 2, %s21
      %p279 = scmp.lt.s32.totalorder %s20, 1
      %s280 = scalar_select %p279, %s20, 1
      %p281 = scmp.lt.s32.totalorder %s278, 1
      %s282 = scalar_select %p281, %s278, 1
      %s283 = smul.addr %s280, 2
      %s284 = sadd.s32 %s282, %s283
      %s285 = smul.addr %s284, 8
      %s286 = scalar_lea.vmem %s5, %s285
      %s287 = smul.u32 2, %s21
      %p288 = scmp.lt.s32.totalorder %s20, 1
      %s289 = scalar_select %p288, %s20, 1
      %p290 = scmp.lt.s32.totalorder %s287, 1
      %s291 = scalar_select %p290, %s287, 1
      %s292 = smul.addr %s289, 2
      %s293 = sadd.s32 %s291, %s292
      %s294 = smul.addr %s293, 4
      %s295 = scalar_lea.vmem %s0, %s294
      %s296 = smul.u32 2, %s21
      %s297 = sadd.s32 %s21, 1
      %s298 = smul.u32 %s297, 2
      %p299 = scmp.lt.s32.totalorder %s298, 1
      %s300 = scalar_select %p299, %s298, 1
      %p301 = scmp.lt.s32.totalorder %s20, 1
      %s302 = scalar_select %p301, %s20, 1
      %p303 = scmp.lt.s32.totalorder %s300, 1
      %s304 = scalar_select %p303, %s300, 1
      %s305 = smul.addr %s302, 2
      %s306 = sadd.s32 %s304, %s305
      %s307 = smul.addr %s306, 4
      %s308 = scalar_lea.vmem %s1, %s307
      %s309 = sadd.s32 %s21, 1
      %s310 = smul.u32 %s309, 2
      %p311 = scmp.lt.s32.totalorder %s310, 1
      %s312 = scalar_select %p311, %s310, 1
      %s313 = smul.u32 2, %s21
      %p314 = scmp.lt.s32.totalorder %s20, 1
      %s315 = scalar_select %p314, %s20, 1
      %p316 = scmp.lt.s32.totalorder %s313, 1
      %s317 = scalar_select %p316, %s313, 1
      %s318 = smul.addr %s315, 2
      %s319 = sadd.s32 %s317, %s318
      %s320 = smul.addr %s319, 8
      %s321 = scalar_lea.vmem %s5, %s320
      %s322 = smul.u32 2, %s21
      %v323 = vld [vmem:[%s295] sm:$0xff]
      %v324 = vld [vmem:[%s2] sm:$0xff]
      %v325 = vlaneseq
      %v326 = vand.u32 %v325, 127
      %v327 = vadd.s32 %v326, 128
      %vm328 = vcmp.lt.s32.totalorder %v326, 0
      %v329 = vsub.s32 0, %v326
      %v330 = vsel %vm328, %v329, %v326
      %v331 = vshrl.u32 %v330, 4
      %v332 = vand.u32 %v330, 15
      %v333 = vsub.s32 0, %v332
      %v334 = vsel %vm328, %v333, %v332
      %vm335 = vcmp.lt.s32.totalorder %v327, 0
      %v336 = vsub.s32 0, %v327
      %v337 = vsel %vm335, %v336, %v327
      %v338 = vshrl.u32 %v337, 4
      %v339 = vand.u32 %v337, 15
      %v340 = vsub.s32 0, %v339
      %v341 = vsel %vm335, %v340, %v339
      %vm342 = vcmp.ne.s32.totalorder %v334, 0
      %vm343 = vcmp.ne.s32.totalorder %v341, 0
      %vm344 = vcmp.lt.s32.totalorder %v334, 0
      %vm345 = vcmp.lt.s32.totalorder %v341, 0
      %vm346 = vmand %vm344, %vm342
      %vm347 = vmand %vm345, %vm343
      %v348 = vadd.s32 %v334, 16
      %v349 = vadd.s32 %v341, 16
      %v350 = vsel %vm346, %v348, %v334
      %v351 = vsel %vm347, %v349, %v341
      %vm352 = vcmp.eq.s32.totalorder %v350, 15
      %vm353 = vcmp.eq.s32.totalorder %v351, 15
      %vm354 = vcmp.ge.s32.totalorder %v326, 240
      %vm355 = vcmp.ge.s32.totalorder %v327, 240
      %v357 = vcombine.high %v323, %v323
      %359 = vrot.lane.b32.xlu0 %v323, 127
      %v360 = vpop.permute.xlu0 %359
      %361 = vrot.lane.b32.xlu0 %v357, 127
      %v362 = vpop.permute.xlu0 %361
      %vm363 = vcmp.lt.s32.totalorder %v326, 127
      %v364 = vsel %vm363, %v360, %v362
      %v365 = vsel %vm363, %v362, %v360
      %v366 = vsel %vm352, 1, 0
      %v367 = vsel %vm353, 1, 0
      %vm368 = vcmp.eq.s32.totalorder %v366, 1
      %vm369 = vcmp.eq.s32.totalorder %v367, 1
      %v370 = vsel %vm368, 0.0, %v364
      %v371 = vsel %vm369, 0.0, %v365
      %372 = vrot.lane.b32.xlu0 %v323, 112
      %v373 = vpop.permute.xlu0 %372
      %374 = vrot.lane.b32.xlu0 %v357, 112
      %v375 = vpop.permute.xlu0 %374
      %vm376 = vcmp.lt.s32.totalorder %v326, 112
      %v377 = vsel %vm376, %v373, %v375
      %v378 = vsel %vm376, %v375, %v373
      %v379 = vsel %vm354, 1, 0
      %v380 = vsel %vm355, 1, 0
      %vm381 = vcmp.eq.s32.totalorder %v379, 1
      %vm382 = vcmp.eq.s32.totalorder %v380, 1
      %v383 = vsel %vm381, 0.0, %v377
      %v384 = vsel %vm382, 0.0, %v378
      %385 = vrot.lane.b32.xlu0 %v383, 127
      %v386 = vpop.permute.xlu0 %385
      %387 = vrot.lane.b32.xlu0 %v384, 127
      %v388 = vpop.permute.xlu0 %387
      %v389 = vsel %vm363, %v386, %v388
      %v390 = vsel %vm363, %v388, %v386
      %v391 = vsel %vm368, 0.0, %v389
      %v392 = vsel %vm369, 0.0, %v390
      %v395 = vrot.slane %v370, 4
      %v396 = vrot.slane %v371, 4
      %v401 = vrot.slane %v391, 4
      %v402 = vrot.slane %v392, 4
      %vm405 = vcmask 1043456
      %v406 = vsel %vm405, %v323, %v395
      %v407 = vsel %vm405, %v357, %v396
      %v408 = vsel %vm405, %v383, %v401
      %v409 = vsel %vm405, %v384, %v402
      %vm410 = vcmask 130048
      %v412 = vsel %vm410, %v324, 0
      %414 = vmatprep.subr.mxu0 %v407
      %415 = vmatpush1.msra.mxu0 %v406
      %416 = vmatprep.subr.mxu0 %v409
      %417 = vmatpush1.msra.mxu0 %v408
      %418 = vmatprep.subr.mxu0 0.0
      %419 = vmatpush1.msra.mxu0 0.0
      %420 = vmatprep.subr.mxu0 0.0
      %421 = vmatpush1.msra.mxu0 0.0
      %422 = vmatprep.subr.mxu0 0.0
      %423 = vmatpush1.msra.mxu0 0.0
      %424 = vmatprep.subr.mxu0 0.0
      %425 = vmatpush1.msra.mxu0 0.0
      %426 = vmatprep.subr.mxu0 0.0
      %427 = vmatpush1.msra.mxu0 0.0
      %428 = vmatprep.subr.mxu0 0.0
      %429 = vmatpush1.msra.mxu0 0.0
      %430 = vmatprep.subr.mxu0 0.0
      %431 = vmatpush1.msra.mxu0 0.0
      %432 = vmatprep.subr.mxu0 0.0
      %433 = vmatpush1.msra.mxu0 0.0
      %434 = vmatprep.subr.mxu0 0.0
      %435 = vmatpush1.msra.mxu0 0.0
      %436 = vmatprep.subr.mxu0 0.0
      %437 = vmatpush1.msra.mxu0 0.0
      %438 = vmatprep.subr.mxu0 0.0
      %439 = vmatpush1.msra.mxu0 0.0
      %440 = vmatprep.subr.mxu0 0.0
      %441 = vmatpush1.msra.mxu0 0.0
      %442 = vmatprep.subr.mxu0 0.0
      %443 = vmatpush1.msra.mxu0 0.0
      %444 = vmatprep.subr.mxu0 0.0
      %445 = vmatpush1.msra.mxu0 0.0
      %446 = vmatprep.subr.mxu0 0.0
      %447 = vmatpush1.msra.mxu0 0.0
      %448 = vmatprep.subr.mxu0 0.0
      %449 = vmatpush1.msra.mxu0 0.0
      %450 = vmatprep.subr.mxu0 0.0
      %451 = vmatpush1.msra.mxu0 0.0
      %452 = vmatprep.subr.mxu0 0.0
      %453 = vmatpush1.msra.mxu0 0.0
      %454 = vmatprep.subr.mxu0 0.0
      %455 = vmatpush1.msra.mxu0 0.0
      %456 = vmatprep.subr.mxu0 0.0
      %457 = vmatpush1.msra.mxu0 0.0
      %458 = vmatprep.subr.mxu0 0.0
      %459 = vmatpush1.msra.mxu0 0.0
      %460 = vmatprep.subr.mxu0 0.0
      %461 = vmatpush1.msra.mxu0 0.0
      %462 = vmatprep.subr.mxu0 0.0
      %463 = vmatpush1.msra.mxu0 0.0
      %464 = vmatprep.subr.mxu0 0.0
      %465 = vmatpush1.msra.mxu0 0.0
      %466 = vmatprep.subr.mxu0 0.0
      %467 = vmatpush1.msra.mxu0 0.0
      %468 = vmatprep.subr.mxu0 0.0
      %469 = vmatpush1.msra.mxu0 0.0
      %470 = vmatprep.subr.mxu0 0.0
      %471 = vmatpush1.msra.mxu0 0.0
      %472 = vmatprep.subr.mxu0 0.0
      %473 = vmatpush1.msra.mxu0 0.0
      %474 = vmatprep.subr.mxu0 0.0
      %475 = vmatpush1.msra.mxu0 0.0
      %476 = vmatprep.subr.mxu0 0.0
      %477 = vmatpush1.msra.mxu0 0.0
      %478 = vmatprep.mubr.f32.mxu0 0.0
      %479 = vmatmul.mubr.f32.gmra.mrb[0].mxu0 %v412
      %v480 = vpop.f32.mrb[0].mxu0
      %v481 = vadd.f32 0.0, %v480
      %v482 = vpop.f32.mrb[0].mxu0
      %v483 = vadd.f32 0.0, %v482
      %484 = vdwg.mxu0
      %v485 = vld [vmem:[%s3] sm:$0xff]
      %487 = vset.pattern.permute.xlu0 0
      %488 = vperm.xlu0 %487, %v485
      %v489 = vpop.permute.xlu0 %488
      %v491 = vmul.f32 %v481, %v489
      %v492 = vmul.f32 %v483, %v489
      %v493 = vld [vmem:[%s4] sm:$0xff]
      %495 = vset.pattern.permute.xlu0 0
      %496 = vperm.xlu0 %495, %v493
      %v497 = vpop.permute.xlu0 %496
      %v499 = vadd.f32 %v491, %v497
      %v500 = vadd.f32 %v492, %v497
      %vm501 = vcmp.ge.f32.partialorder %v499, 0.0
      %vm502 = vcmp.ge.f32.partialorder %v500, 0.0
      %v503 = vmul.f32 %v499, 0.2
      %v504 = vmul.f32 %v500, 0.2
      %v505 = vsel %vm501, %v499, %v503
      %v506 = vsel %vm502, %v500, %v504
      %507 = vst [vmem:[%s321] sm:$0xff] %v505
      %508 = vst [vmem:[%s321 + $0x8] sm:$0xff] %v506
      %s509 = smul.u32 2, %s21
      %p510 = scmp.lt.s32.totalorder %s20, 1
      %s511 = scalar_select %p510, %s20, 1
      %p512 = scmp.lt.s32.totalorder %s509, 1
      %s513 = scalar_select %p512, %s509, 1
      %s514 = smul.addr %s511, 2
      %s515 = sadd.s32 %s513, %s514
      %s516 = smul.addr %s515, 8
      %s517 = scalar_lea.vmem %s5, %s516
      // Predicated region
      $region41: #{conv_downsampling_block.3} parent=39 // pred_check
        %p518 = pneg %p175
      $region42: #{conv_downsampling_block.3} parent=39 // pred_check_branch
        %520 = sbr.rel (%p518) target = $region44
      $region43: #{conv_downsampling_block.3} parent=39 // pred_region
        %s521 = smul.u32 2, %s21
      $region44: #{conv_downsampling_block.3} parent=39 // pred_fallthru
        _
    $region40: #{conv_downsampling_block.3} parent=5 // pred_fallthru
      _
    %p522 = scmp.le.s32.totalorder 2, %s11
    // Predicated region
    $region45: #{conv_downsampling_block.3} parent=5 // pred_check
      %p523 = pneg %p522
    $region46: #{conv_downsampling_block.3} parent=5 // pred_check_branch
      %525 = sbr.rel (%p523) target = $region48
    $region47: #{conv_downsampling_block.3} parent=5 // pred_region
      %s526 = ssub.s32 %s11, 2
      // Predicated region
      $region49: #{conv_downsampling_block.3} parent=47 // pred_check
        %p527 = pneg %p181
      $region50: #{conv_downsampling_block.3} parent=47 // pred_check_branch
        %529 = sbr.rel (%p527) target = $region52
      $region51: #{conv_downsampling_block.3} parent=47 // pred_region
        %s530 = smul.u32 2, %s23
        %p531 = scmp.lt.s32.totalorder %s22, 1
        %s532 = scalar_select %p531, %s22, 1
        %p533 = scmp.lt.s32.totalorder %s530, 1
        %s534 = scalar_select %p533, %s530, 1
        %s535 = smul.addr %s532, 2
        %s536 = sadd.s32 %s534, %s535
        %s537 = smul.addr %s536, 8
        %s538 = scalar_lea.vmem %s5, %s537
      $region52: #{conv_downsampling_block.3} parent=47 // pred_fallthru
        _
    $region48: #{conv_downsampling_block.3} parent=5 // pred_fallthru
      _
  $region6: #{conv_downsampling_block.3} parent=0 // loop_footer
    %s15 = sadd.s32 1, %s11
  $region7: #{conv_downsampling_block.3} parent=0 // loop_footer_branch
    %10 = sbr.rel target = $region3
  $region8: #{conv_downsampling_block.3} parent=0 // loop_exit
    _

// kernel: conv_downsampling_block.2
$region0: #{conv_downsampling_block.2}
  #allocation0 [shape = 'u32[]', space=smem, size = 0x4, offset = 0x4, fixed_abs, tag = 'smem constant byte address 0x4 - core index']
  #allocation1 [shape = 'u32[144,128]{1,0:T(1,128)}', space=vmem, size = 0x12000, scoped, tag = 'internal scratch']
  %s0 = inlined_call_operand.vmem [shape: f32[2,4,256], index: 0, kind: input, shape index: {}, may-alias: {0,1}]
  %s1 = inlined_call_operand.vmem [shape: f32[2,4,256], index: 1, kind: input, shape index: {}, may-alias: {0,1}]
  %s2 = inlined_call_operand.vmem [shape: f32[8,16], index: 2, kind: input, shape index: {}]
  %s3 = inlined_call_operand.vmem [shape: f32[2,1,8,1], index: 3, kind: output, shape index: {0}]
  %s4 = inlined_call_operand.vmem [shape: f32[2,1,8,1], index: 4, kind: output, shape index: {1}]
  %5 = xla_tuple %s3, %s4
  %s6 = sld [smem:[#allocation0]]
  $region53: #{conv_downsampling_block.2} parent=0
    _
  %s8 = ssub.s32 1, %s6
  %s9 = scalar_select 0, %s8, %s6
  loop: start=0, step=1, limit=4
  $region2: #{conv_downsampling_block.2} parent=0 // loop_pre_header
    _
  $region3: #{conv_downsampling_block.2} parent=0 // loop_header
    %s11 = sphi 0, %s15
    %p12 = scmp.ge.s32.totalorder %s11, 4
    %s18 = sphi 0, %s30
    %s19 = sphi 0, %s26
    %s20 = sphi 0, %s18
    %s21 = sphi 0, %s19
    %s22 = sphi 0, %s20
    %s23 = sphi 0, %s21
    %s35 = sphi 0, %s37
    %s38 = sphi 0, %s35
    %s39 = sphi 0, %s38
    %s55 = sphi 0, %s39
    %s71 = sphi 0, %s73
    %s74 = sphi 0, %s71
    %s75 = sphi 0, %s74
    %s91 = sphi 0, %s75
    %s95 = sphi 0, %s95
    %s97 = sphi 0, %s95
    %s98 = sphi 0, %s97
    %s112 = sphi 0, %s98
    %s120 = sphi 0, %s122
    %s123 = sphi 0, %s120
    %s124 = sphi 0, %s123
    %s140 = sphi 0, %s124
    %s148 = sphi 0, %s150
    %s151 = sphi 0, %s148
    %s152 = sphi 0, %s151
    %s168 = sphi 0, %s152
  $region4: #{conv_downsampling_block.2} parent=0 // loop_header_branch
    %14 = sbr.rel (%p12) target = $region8
  $region5: #{conv_downsampling_block.2} parent=0 // loop_body
    %s16 = ssub.s32 %s11, 1
    %s17 = ssub.s32 %s11, 2
    %s24 = sadd.s32 1, %s19
    %p25 = scmp.ge.s32.totalorder %s24, 1
    %s26 = scalar_select %p25, 0, %s24
    %s27 = sadd.s32 1, %s18
    %s28 = scalar_select %p25, %s27, %s18
    %p29 = scmp.ge.s32.totalorder %s28, 2
    %s30 = scalar_select %p29, 0, %s28
    %s31 = ssub.s32 %s18, %s30
    %s32 = ssub.s32 %s19, %s26
    %s33 = sor.u32 %s31, %s32
    %p34 = scmp.eq.s32.totalorder %s33, 0
    %s36 = sadd.s32 %s35, 1
    %s37 = scalar_select %p34, %s35, %s36
    %p40 = pneg %p34
    %p41 = scmp.eq.s32.totalorder %s11, 1
    %p42 = por %p40, %p41
    %p43 = scmp.ne.s32.totalorder %s35, %s38
    %p44 = scmp.eq.s32.totalorder %s11, 0
    %p45 = por %p43, %p44
    %p46 = scmp.ne.s32.totalorder %s35, %s38
    %p47 = scmp.eq.s32.totalorder %s16, 1
    %p48 = por %p46, %p47
    %p49 = scmp.ne.s32.totalorder %s38, %s39
    %p50 = scmp.eq.s32.totalorder %s16, 0
    %p51 = por %p49, %p50
    %p52 = scmp.ne.s32.totalorder %s38, %s39
    %p53 = scmp.eq.s32.totalorder %s17, 1
    %p54 = por %p52, %p53
    %p56 = scmp.ne.s32.totalorder %s39, %s55
    %p57 = scmp.eq.s32.totalorder %s17, 0
    %p58 = por %p56, %p57
    %s59 = sadd.s32 %s19, 1
    %s60 = smul.u32 %s59, 2
    %p61 = scmp.lt.s32.totalorder %s60, 1
    %s62 = scalar_select %p61, %s60, 1
    %s63 = sadd.s32 %s26, 1
    %s64 = smul.u32 %s63, 2
    %p65 = scmp.lt.s32.totalorder %s64, 1
    %s66 = scalar_select %p65, %s64, 1
    %s67 = ssub.s32 %s18, %s30
    %s68 = ssub.s32 %s62, %s66
    %s69 = sor.u32 %s67, %s68
    %p70 = scmp.eq.s32.totalorder %s69, 0
    %s72 = sadd.s32 %s71, 1
    %s73 = scalar_select %p70, %s71, %s72
    %p76 = pneg %p70
    %p77 = scmp.eq.s32.totalorder %s11, 1
    %p78 = por %p76, %p77
    %p79 = scmp.ne.s32.totalorder %s71, %s74
    %p80 = scmp.eq.s32.totalorder %s11, 0
    %p81 = por %p79, %p80
    %p82 = scmp.ne.s32.totalorder %s71, %s74
    %p83 = scmp.eq.s32.totalorder %s16, 1
    %p84 = por %p82, %p83
    %p85 = scmp.ne.s32.totalorder %s74, %s75
    %p86 = scmp.eq.s32.totalorder %s16, 0
    %p87 = por %p85, %p86
    %p88 = scmp.ne.s32.totalorder %s74, %s75
    %p89 = scmp.eq.s32.totalorder %s17, 1
    %p90 = por %p88, %p89
    %p92 = scmp.ne.s32.totalorder %s75, %s91
    %p93 = scmp.eq.s32.totalorder %s17, 0
    %p94 = por %p92, %p93
    %s96 = sadd.s32 %s95, 1
    %p99 = scmp.eq.s32.totalorder %s11, 1
    %p100 = scmp.ne.s32.totalorder %s95, %s97
    %p101 = scmp.eq.s32.totalorder %s11, 0
    %p102 = por %p100, %p101
    %p103 = scmp.ne.s32.totalorder %s95, %s97
    %p104 = scmp.eq.s32.totalorder %s16, 1
    %p105 = por %p103, %p104
    %p106 = scmp.ne.s32.totalorder %s97, %s98
    %p107 = scmp.eq.s32.totalorder %s16, 0
    %p108 = por %p106, %p107
    %p109 = scmp.ne.s32.totalorder %s97, %s98
    %p110 = scmp.eq.s32.totalorder %s17, 1
    %p111 = por %p109, %p110
    %p113 = scmp.ne.s32.totalorder %s98, %s112
    %p114 = scmp.eq.s32.totalorder %s17, 0
    %p115 = por %p113, %p114
    %s116 = ssub.s32 %s18, %s30
    %s117 = ssub.s32 %s19, %s26
    %s118 = sor.u32 %s116, %s117
    %p119 = scmp.eq.s32.totalorder %s118, 0
    %s121 = sadd.s32 %s120, 1
    %s122 = scalar_select %p119, %s120, %s121
    %p125 = pneg %p119
    %p126 = scmp.eq.s32.totalorder %s11, 1
    %p127 = por %p125, %p126
    %p128 = scmp.ne.s32.totalorder %s120, %s123
    %p129 = scmp.eq.s32.totalorder %s11, 0
    %p130 = por %p128, %p129
    %p131 = scmp.ne.s32.totalorder %s120, %s123
    %p132 = scmp.eq.s32.totalorder %s16, 1
    %p133 = por %p131, %p132
    %p134 = scmp.ne.s32.totalorder %s123, %s124
    %p135 = scmp.eq.s32.totalorder %s16, 0
    %p136 = por %p134, %p135
    %p137 = scmp.ne.s32.totalorder %s123, %s124
    %p138 = scmp.eq.s32.totalorder %s17, 1
    %p139 = por %p137, %p138
    %p141 = scmp.ne.s32.totalorder %s124, %s140
    %p142 = scmp.eq.s32.totalorder %s17, 0
    %p143 = por %p141, %p142
    %s144 = ssub.s32 %s18, %s30
    %s145 = ssub.s32 %s19, %s26
    %s146 = sor.u32 %s144, %s145
    %p147 = scmp.eq.s32.totalorder %s146, 0
    %s149 = sadd.s32 %s148, 1
    %s150 = scalar_select %p147, %s148, %s149
    %p153 = pneg %p147
    %p154 = scmp.eq.s32.totalorder %s11, 1
    %p155 = por %p153, %p154
    %p156 = scmp.ne.s32.totalorder %s148, %s151
    %p157 = scmp.eq.s32.totalorder %s11, 0
    %p158 = por %p156, %p157
    %p159 = scmp.ne.s32.totalorder %s148, %s151
    %p160 = scmp.eq.s32.totalorder %s16, 1
    %p161 = por %p159, %p160
    %p162 = scmp.ne.s32.totalorder %s151, %s152
    %p163 = scmp.eq.s32.totalorder %s16, 0
    %p164 = por %p162, %p163
    %p165 = scmp.ne.s32.totalorder %s151, %s152
    %p166 = scmp.eq.s32.totalorder %s17, 1
    %p167 = por %p165, %p166
    %p169 = scmp.ne.s32.totalorder %s152, %s168
    %p170 = scmp.eq.s32.totalorder %s17, 0
    %p171 = por %p169, %p170
    %p172 = scmp.le.s32.totalorder 1, %s11
    %p173 = scmp.lt.s32.totalorder %s11, 3
    %p174 = pnand %p172, %p173
    %p175 = pneg %p174
    // Predicated region
    $region9: #{conv_downsampling_block.2} parent=5 // pred_check
      _
    $region10: #{conv_downsampling_block.2} parent=5 // pred_check_branch
      %177 = sbr.rel (%p174) target = $region12
    $region11: #{conv_downsampling_block.2} parent=5 // pred_region
      %s178 = ssub.s32 %s11, 1
      // Predicated region
      $region13: #{conv_downsampling_block.2} parent=11 // pred_check
        %p179 = pneg %p108
      $region14: #{conv_downsampling_block.2} parent=11 // pred_check_branch
        %181 = sbr.rel (%p179) target = $region16
      $region15: #{conv_downsampling_block.2} parent=11 // pred_region
        _
      $region16: #{conv_downsampling_block.2} parent=11 // pred_fallthru
        _
    $region12: #{conv_downsampling_block.2} parent=5 // pred_fallthru
      _
    %p182 = scmp.lt.s32.totalorder %s11, 2
    // Predicated region
    $region17: #{conv_downsampling_block.2} parent=5 // pred_check
      %p183 = pneg %p182
    $region18: #{conv_downsampling_block.2} parent=5 // pred_check_branch
      %185 = sbr.rel (%p183) target = $region20
    $region19: #{conv_downsampling_block.2} parent=5 // pred_region
      // Predicated region
      $region21: #{conv_downsampling_block.2} parent=19 // pred_check
        %p186 = pneg %p45
      $region22: #{conv_downsampling_block.2} parent=19 // pred_check_branch
        %188 = sbr.rel (%p186) target = $region24
      $region23: #{conv_downsampling_block.2} parent=19 // pred_region
        %s189 = smul.u32 2, %s19
        %p190 = scmp.lt.s32.totalorder %s18, 1
        %s191 = scalar_select %p190, %s18, 1
        %p192 = scmp.lt.s32.totalorder %s189, 1
        %s193 = scalar_select %p192, %s189, 1
        %s194 = smul.addr %s191, 2
        %s195 = sadd.s32 %s193, %s194
        %s196 = smul.addr %s195, 4
        %s197 = scalar_lea.vmem %s0, %s196
        %s198 = smul.u32 2, %s19
      $region24: #{conv_downsampling_block.2} parent=19 // pred_fallthru
        _
      // Predicated region
      $region25: #{conv_downsampling_block.2} parent=19 // pred_check
        %p199 = pneg %p81
      $region26: #{conv_downsampling_block.2} parent=19 // pred_check_branch
        %201 = sbr.rel (%p199) target = $region28
      $region27: #{conv_downsampling_block.2} parent=19 // pred_region
        %s202 = sadd.s32 %s19, 1
        %s203 = smul.u32 %s202, 2
        %p204 = scmp.lt.s32.totalorder %s203, 1
        %s205 = scalar_select %p204, %s203, 1
        %p206 = scmp.lt.s32.totalorder %s18, 1
        %s207 = scalar_select %p206, %s18, 1
        %p208 = scmp.lt.s32.totalorder %s205, 1
        %s209 = scalar_select %p208, %s205, 1
        %s210 = smul.addr %s207, 2
        %s211 = sadd.s32 %s209, %s210
        %s212 = smul.addr %s211, 4
        %s213 = scalar_lea.vmem %s1, %s212
        %s214 = sadd.s32 %s19, 1
        %s215 = smul.u32 %s214, 2
        %p216 = scmp.lt.s32.totalorder %s215, 1
        %s217 = scalar_select %p216, %s215, 1
      $region28: #{conv_downsampling_block.2} parent=19 // pred_fallthru
        _
    $region20: #{conv_downsampling_block.2} parent=5 // pred_fallthru
      _
    %p218 = scmp.le.s32.totalorder 1, %s11
    %p219 = scmp.lt.s32.totalorder %s11, 3
    %p220 = pnand %p218, %p219
    %p221 = pneg %p220
    // Predicated region
    $region29: #{conv_downsampling_block.2} parent=5 // pred_check
      _
    $region30: #{conv_downsampling_block.2} parent=5 // pred_check_branch
      %223 = sbr.rel (%p220) target = $region32
    $region31: #{conv_downsampling_block.2} parent=5 // pred_region
      %s224 = ssub.s32 %s11, 1
      %s225 = smul.u32 2, %s21
      %p226 = scmp.lt.s32.totalorder %s20, 1
      %s227 = scalar_select %p226, %s20, 1
      %p228 = scmp.lt.s32.totalorder %s225, 1
      %s229 = scalar_select %p228, %s225, 1
      %s230 = smul.addr %s227, 2
      %s231 = sadd.s32 %s229, %s230
      %s232 = smul.addr %s231, 4
      %s233 = scalar_lea.vmem %s0, %s232
      %p234 = pneg %p51
      %p235 = pneg %p48
      %s236 = sadd.s32 %s21, 1
      %s237 = smul.u32 %s236, 2
      %p238 = scmp.lt.s32.totalorder %s237, 1
      %s239 = scalar_select %p238, %s237, 1
      %p240 = scmp.lt.s32.totalorder %s20, 1
      %s241 = scalar_select %p240, %s20, 1
      %p242 = scmp.lt.s32.totalorder %s239, 1
      %s243 = scalar_select %p242, %s239, 1
      %s244 = smul.addr %s241, 2
      %s245 = sadd.s32 %s243, %s244
      %s246 = smul.addr %s245, 4
      %s247 = scalar_lea.vmem %s1, %s246
      %p248 = pneg %p87
      %p249 = pneg %p84
      %p250 = pneg %p108
      %p251 = pneg %p105
      %p252 = pneg %p136
      %p253 = pneg %p133
      %p254 = scmp.lt.s32.totalorder %s20, 1
      %s255 = scalar_select %p254, %s20, 1
      %p256 = scmp.lt.s32.totalorder %s21, 0
      %s257 = scalar_select %p256, %s21, 0
      %s258 = sadd.s32 %s257, %s255
      %s259 = smul.addr %s258, 8
      %s260 = scalar_lea.vmem %s3, %s259
      %p261 = pneg %p164
      %p262 = pneg %p161
      %p263 = scmp.lt.s32.totalorder %s20, 1
      %s264 = scalar_select %p263, %s20, 1
      %p265 = scmp.lt.s32.totalorder %s21, 0
      %s266 = scalar_select %p265, %s21, 0
      %s267 = sadd.s32 %s266, %s264
      %s268 = smul.addr %s267, 8
      %s269 = scalar_lea.vmem %s4, %s268
      %s270 = smul.u32 2, %s21
      %p271 = scmp.lt.s32.totalorder %s20, 1
      %s272 = scalar_select %p271, %s20, 1
      %p273 = scmp.lt.s32.totalorder %s270, 1
      %s274 = scalar_select %p273, %s270, 1
      %s275 = smul.addr %s272, 2
      %s276 = sadd.s32 %s274, %s275
      %s277 = smul.addr %s276, 4
      %s278 = scalar_lea.vmem %s0, %s277
      %s279 = smul.u32 2, %s21
      %s280 = sadd.s32 %s21, 1
      %s281 = smul.u32 %s280, 2
      %p282 = scmp.lt.s32.totalorder %s281, 1
      %s283 = scalar_select %p282, %s281, 1
      %p284 = scmp.lt.s32.totalorder %s20, 1
      %s285 = scalar_select %p284, %s20, 1
      %p286 = scmp.lt.s32.totalorder %s283, 1
      %s287 = scalar_select %p286, %s283, 1
      %s288 = smul.addr %s285, 2
      %s289 = sadd.s32 %s287, %s288
      %s290 = smul.addr %s289, 4
      %s291 = scalar_lea.vmem %s1, %s290
      %s292 = sadd.s32 %s21, 1
      %s293 = smul.u32 %s292, 2
      %p294 = scmp.lt.s32.totalorder %s293, 1
      %s295 = scalar_select %p294, %s293, 1
      %p296 = scmp.lt.s32.totalorder %s20, 1
      %s297 = scalar_select %p296, %s20, 1
      %p298 = scmp.lt.s32.totalorder %s21, 0
      %s299 = scalar_select %p298, %s21, 0
      %s300 = sadd.s32 %s299, %s297
      %s301 = smul.addr %s300, 8
      %s302 = scalar_lea.vmem %s3, %s301
      %p303 = scmp.lt.s32.totalorder %s20, 1
      %s304 = scalar_select %p303, %s20, 1
      %p305 = scmp.lt.s32.totalorder %s21, 0
      %s306 = scalar_select %p305, %s21, 0
      %s307 = sadd.s32 %s306, %s304
      %s308 = smul.addr %s307, 8
      %s309 = scalar_lea.vmem %s4, %s308
      %v310 = vld [vmem:[%s278] sm:$0xff]
      %v311 = vld [vmem:[%s2] sm:$0xff]
      %v312 = vlaneseq
      %v313 = vand.u32 %v312, 127
      %v314 = vadd.s32 %v313, 128
      %vm315 = vcmp.lt.s32.totalorder %v313, 0
      %v316 = vsub.s32 0, %v313
      %v317 = vsel %vm315, %v316, %v313
      %v318 = vshrl.u32 %v317, 4
      %v319 = vand.u32 %v317, 15
      %v320 = vsub.s32 0, %v319
      %v321 = vsel %vm315, %v320, %v319
      %vm322 = vcmp.lt.s32.totalorder %v314, 0
      %v323 = vsub.s32 0, %v314
      %v324 = vsel %vm322, %v323, %v314
      %v325 = vshrl.u32 %v324, 4
      %v326 = vand.u32 %v324, 15
      %v327 = vsub.s32 0, %v326
      %v328 = vsel %vm322, %v327, %v326
      %vm329 = vcmp.ne.s32.totalorder %v321, 0
      %vm330 = vcmp.ne.s32.totalorder %v328, 0
      %vm331 = vcmp.lt.s32.totalorder %v321, 0
      %vm332 = vcmp.lt.s32.totalorder %v328, 0
      %vm333 = vmand %vm331, %vm329
      %vm334 = vmand %vm332, %vm330
      %v335 = vadd.s32 %v321, 16
      %v336 = vadd.s32 %v328, 16
      %v337 = vsel %vm333, %v335, %v321
      %v338 = vsel %vm334, %v336, %v328
      %vm339 = vcmp.eq.s32.totalorder %v337, 15
      %vm340 = vcmp.eq.s32.totalorder %v338, 15
      %vm341 = vcmp.ge.s32.totalorder %v313, 240
      %vm342 = vcmp.ge.s32.totalorder %v314, 240
      %v344 = vcombine.high %v310, %v310
      %346 = vrot.lane.b32.xlu0 %v310, 127
      %v347 = vpop.permute.xlu0 %346
      %348 = vrot.lane.b32.xlu0 %v344, 127
      %v349 = vpop.permute.xlu0 %348
      %vm350 = vcmp.lt.s32.totalorder %v313, 127
      %v351 = vsel %vm350, %v347, %v349
      %v352 = vsel %vm350, %v349, %v347
      %v353 = vsel %vm339, 1, 0
      %v354 = vsel %vm340, 1, 0
      %vm355 = vcmp.eq.s32.totalorder %v353, 1
      %vm356 = vcmp.eq.s32.totalorder %v354, 1
      %v357 = vsel %vm355, 0.0, %v351
      %v358 = vsel %vm356, 0.0, %v352
      %359 = vrot.lane.b32.xlu0 %v310, 112
      %v360 = vpop.permute.xlu0 %359
      %361 = vrot.lane.b32.xlu0 %v344, 112
      %v362 = vpop.permute.xlu0 %361
      %vm363 = vcmp.lt.s32.totalorder %v313, 112
      %v364 = vsel %vm363, %v360, %v362
      %v365 = vsel %vm363, %v362, %v360
      %v366 = vsel %vm341, 1, 0
      %v367 = vsel %vm342, 1, 0
      %vm368 = vcmp.eq.s32.totalorder %v366, 1
      %vm369 = vcmp.eq.s32.totalorder %v367, 1
      %v370 = vsel %vm368, 0.0, %v364
      %v371 = vsel %vm369, 0.0, %v365
      %372 = vrot.lane.b32.xlu0 %v370, 127
      %v373 = vpop.permute.xlu0 %372
      %374 = vrot.lane.b32.xlu0 %v371, 127
      %v375 = vpop.permute.xlu0 %374
      %v376 = vsel %vm350, %v373, %v375
      %v377 = vsel %vm350, %v375, %v373
      %v378 = vsel %vm355, 0.0, %v376
      %v379 = vsel %vm356, 0.0, %v377
      %v382 = vrot.slane %v357, 4
      %v383 = vrot.slane %v358, 4
      %v388 = vrot.slane %v378, 4
      %v389 = vrot.slane %v379, 4
      %vm392 = vcmask 1043456
      %v393 = vsel %vm392, %v310, %v382
      %v394 = vsel %vm392, %v344, %v383
      %v395 = vsel %vm392, %v370, %v388
      %v396 = vsel %vm392, %v371, %v389
      %vm397 = vcmask 130048
      %v399 = vsel %vm397, %v311, 0
      %401 = vmatprep.subr.mxu0 %v394
      %402 = vmatpush1.msra.mxu0 %v393
      %403 = vmatprep.subr.mxu0 %v396
      %404 = vmatpush1.msra.mxu0 %v395
      %405 = vmatprep.subr.mxu0 0.0
      %406 = vmatpush1.msra.mxu0 0.0
      %407 = vmatprep.subr.mxu0 0.0
      %408 = vmatpush1.msra.mxu0 0.0
      %409 = vmatprep.subr.mxu0 0.0
      %410 = vmatpush1.msra.mxu0 0.0
      %411 = vmatprep.subr.mxu0 0.0
      %412 = vmatpush1.msra.mxu0 0.0
      %413 = vmatprep.subr.mxu0 0.0
      %414 = vmatpush1.msra.mxu0 0.0
      %415 = vmatprep.subr.mxu0 0.0
      %416 = vmatpush1.msra.mxu0 0.0
      %417 = vmatprep.subr.mxu0 0.0
      %418 = vmatpush1.msra.mxu0 0.0
      %419 = vmatprep.subr.mxu0 0.0
      %420 = vmatpush1.msra.mxu0 0.0
      %421 = vmatprep.subr.mxu0 0.0
      %422 = vmatpush1.msra.mxu0 0.0
      %423 = vmatprep.subr.mxu0 0.0
      %424 = vmatpush1.msra.mxu0 0.0
      %425 = vmatprep.subr.mxu0 0.0
      %426 = vmatpush1.msra.mxu0 0.0
      %427 = vmatprep.subr.mxu0 0.0
      %428 = vmatpush1.msra.mxu0 0.0
      %429 = vmatprep.subr.mxu0 0.0
      %430 = vmatpush1.msra.mxu0 0.0
      %431 = vmatprep.subr.mxu0 0.0
      %432 = vmatpush1.msra.mxu0 0.0
      %433 = vmatprep.subr.mxu0 0.0
      %434 = vmatpush1.msra.mxu0 0.0
      %435 = vmatprep.subr.mxu0 0.0
      %436 = vmatpush1.msra.mxu0 0.0
      %437 = vmatprep.subr.mxu0 0.0
      %438 = vmatpush1.msra.mxu0 0.0
      %439 = vmatprep.subr.mxu0 0.0
      %440 = vmatpush1.msra.mxu0 0.0
      %441 = vmatprep.subr.mxu0 0.0
      %442 = vmatpush1.msra.mxu0 0.0
      %443 = vmatprep.subr.mxu0 0.0
      %444 = vmatpush1.msra.mxu0 0.0
      %445 = vmatprep.subr.mxu0 0.0
      %446 = vmatpush1.msra.mxu0 0.0
      %447 = vmatprep.subr.mxu0 0.0
      %448 = vmatpush1.msra.mxu0 0.0
      %449 = vmatprep.subr.mxu0 0.0
      %450 = vmatpush1.msra.mxu0 0.0
      %451 = vmatprep.subr.mxu0 0.0
      %452 = vmatpush1.msra.mxu0 0.0
      %453 = vmatprep.subr.mxu0 0.0
      %454 = vmatpush1.msra.mxu0 0.0
      %455 = vmatprep.subr.mxu0 0.0
      %456 = vmatpush1.msra.mxu0 0.0
      %457 = vmatprep.subr.mxu0 0.0
      %458 = vmatpush1.msra.mxu0 0.0
      %459 = vmatprep.subr.mxu0 0.0
      %460 = vmatpush1.msra.mxu0 0.0
      %461 = vmatprep.subr.mxu0 0.0
      %462 = vmatpush1.msra.mxu0 0.0
      %463 = vmatprep.subr.mxu0 0.0
      %464 = vmatpush1.msra.mxu0 0.0
      %465 = vmatprep.mubr.f32.mxu0 0.0
      %466 = vmatmul.mubr.f32.gmra.mrb[0].mxu0 %v399
      %v467 = vpop.f32.mrb[0].mxu0
      %v468 = vadd.f32 0.0, %v467
      %v469 = vpop.f32.mrb[0].mxu0
      %v470 = vadd.f32 0.0, %v469
      %471 = vdwg.mxu0
      %v472 = vadd.f32 %v468, %v470
      %473 = vadd.xlane.f32.xlu0 %v472
      %v474 = vpop.xlane.xlu0 %473
      %vm475 = vcmask 7168
      %476 = vst.msk [vmem:[%s302] sm:$0xff] %vm475, %v474
      %v477 = vmul.f32 %v468, %v468
      %v478 = vmul.f32 %v470, %v470
      %v479 = vadd.f32 %v477, %v478
      %480 = vadd.xlane.f32.xlu0 %v479
      %v481 = vpop.xlane.xlu0 %480
      %482 = vst.msk [vmem:[%s309] sm:$0xff] %vm475, %v481
      %p483 = scmp.lt.s32.totalorder %s20, 1
      %s484 = scalar_select %p483, %s20, 1
      %p485 = scmp.lt.s32.totalorder %s21, 0
      %s486 = scalar_select %p485, %s21, 0
      %s487 = sadd.s32 %s486, %s484
      %s488 = smul.addr %s487, 8
      %s489 = scalar_lea.vmem %s3, %s488
      %p490 = scmp.lt.s32.totalorder %s20, 1
      %s491 = scalar_select %p490, %s20, 1
      %p492 = scmp.lt.s32.totalorder %s21, 0
      %s493 = scalar_select %p492, %s21, 0
      %s494 = sadd.s32 %s493, %s491
      %s495 = smul.addr %s494, 8
      %s496 = scalar_lea.vmem %s4, %s495
      // Predicated region
      $region33: #{conv_downsampling_block.2} parent=31 // pred_check
        %p497 = pneg %p133
      $region34: #{conv_downsampling_block.2} parent=31 // pred_check_branch
        %499 = sbr.rel (%p497) target = $region36
      $region35: #{conv_downsampling_block.2} parent=31 // pred_region
        _
      $region36: #{conv_downsampling_block.2} parent=31 // pred_fallthru
        _
      // Predicated region
      $region37: #{conv_downsampling_block.2} parent=31 // pred_check
        %p500 = pneg %p161
      $region38: #{conv_downsampling_block.2} parent=31 // pred_check_branch
        %502 = sbr.rel (%p500) target = $region40
      $region39: #{conv_downsampling_block.2} parent=31 // pred_region
        _
      $region40: #{conv_downsampling_block.2} parent=31 // pred_fallthru
        _
    $region32: #{conv_downsampling_block.2} parent=5 // pred_fallthru
      _
    %p503 = scmp.le.s32.totalorder 2, %s11
    // Predicated region
    $region41: #{conv_downsampling_block.2} parent=5 // pred_check
      %p504 = pneg %p503
    $region42: #{conv_downsampling_block.2} parent=5 // pred_check_branch
      %506 = sbr.rel (%p504) target = $region44
    $region43: #{conv_downsampling_block.2} parent=5 // pred_region
      %s507 = ssub.s32 %s11, 2
      // Predicated region
      $region45: #{conv_downsampling_block.2} parent=43 // pred_check
        %p508 = pneg %p139
      $region46: #{conv_downsampling_block.2} parent=43 // pred_check_branch
        %510 = sbr.rel (%p508) target = $region48
      $region47: #{conv_downsampling_block.2} parent=43 // pred_region
        %p511 = scmp.lt.s32.totalorder %s22, 1
        %s512 = scalar_select %p511, %s22, 1
        %p513 = scmp.lt.s32.totalorder %s23, 0
        %s514 = scalar_select %p513, %s23, 0
        %s515 = sadd.s32 %s514, %s512
        %s516 = smul.addr %s515, 8
        %s517 = scalar_lea.vmem %s3, %s516
      $region48: #{conv_downsampling_block.2} parent=43 // pred_fallthru
        _
      // Predicated region
      $region49: #{conv_downsampling_block.2} parent=43 // pred_check
        %p518 = pneg %p167
      $region50: #{conv_downsampling_block.2} parent=43 // pred_check_branch
        %520 = sbr.rel (%p518) target = $region52
      $region51: #{conv_downsampling_block.2} parent=43 // pred_region
        %p521 = scmp.lt.s32.totalorder %s22, 1
        %s522 = scalar_select %p521, %s22, 1
        %p523 = scmp.lt.s32.totalorder %s23, 0
        %s524 = scalar_select %p523, %s23, 0
        %s525 = sadd.s32 %s524, %s522
        %s526 = smul.addr %s525, 8
        %s527 = scalar_lea.vmem %s4, %s526
      $region52: #{conv_downsampling_block.2} parent=43 // pred_fallthru
        _
    $region44: #{conv_downsampling_block.2} parent=5 // pred_fallthru
      _
  $region6: #{conv_downsampling_block.2} parent=0 // loop_footer
    %s15 = sadd.s32 1, %s11
  $region7: #{conv_downsampling_block.2} parent=0 // loop_footer_branch
    %10 = sbr.rel target = $region3
  $region8: #{conv_downsampling_block.2} parent=0 // loop_exit
    _

</llo_original>
